<compile_context>
chip_gen: v6e
topology: v6e:2x2x1
jax: 0.10.0
libtpu: 0.0.40
codegen_flags: <defaults>
</compile_context>

<pallas_src>
import numpy as np
import jax
import jax.numpy as jnp
from jax.experimental import pallas as pl
from jax.experimental.pallas import tpu as pltpu

SIZES = (1, 3, 6, 8)  # PSPModule default pyramid sizes (no learnable params)


def build_pool_matrix(H, W, sizes=SIZES, k_pad=None):
    """Build (H*W, K_pad) matrix reproducing torch AdaptiveAvgPool2d bin semantics.

    Bin (i, j) for output size s averages input rows [floor(i*H/s), ceil((i+1)*H/s))
    and cols [floor(j*W/s), ceil((j+1)*W/s)) — identical to PyTorch's adaptive pool.
    Extra columns (K..K_pad) are zero padding for lane-dense output.
    """
    cols = []
    for s in sizes:
        for i in range(s):
            h0 = (i * H) // s
            h1 = -((-(i + 1) * H) // s)  # ceil((i+1)*H/s)
            for j in range(s):
                w0 = (j * W) // s
                w1 = -((-(j + 1) * W) // s)
                m = np.zeros((H, W), dtype=np.float32)
                m[h0:h1, w0:w1] = 1.0 / float((h1 - h0) * (w1 - w0))
                cols.append(m.reshape(-1))
    M = np.stack(cols, axis=1)  # (H*W, K)
    K = M.shape[1]
    if k_pad is None:
        k_pad = ((K + 127) // 128) * 128
    if k_pad != K:
        Mp = np.zeros((H * W, k_pad), dtype=np.float32)
        Mp[:, :K] = M
        M = Mp
    return M, K


def psp_kernel(x_ref, m_ref, o_ref):
    # (TM, H*W) f32 @ (H*W, 128) f32 -> (TM, 128) f32 on the MXU.
    # Kernel is HBM-bound on x on all generations, so f32 operands are free
    # wall-clock-wise on v6e/v7x and only marginal on v5e, and keep accuracy.
    o_ref[...] = jnp.dot(
        x_ref[...], m_ref[...], preferred_element_type=jnp.float32
    )


def _choose_tm(rows, hw, k_pad, elem_bytes=4):
    """Pick the row-tile size and a matching scoped-VMEM limit.

    Budget covers: double-buffered x tile + double-buffered out tile + resident
    pooling matrix (counted at 2 buffers so the limit is valid even if the
    single-buffer request is ignored).  Generation-aware via get_tpu_info.
    """
    try:
        vmem_cap = int(pltpu.get_tpu_info().vmem_capacity_bytes)
    except Exception:
        vmem_cap = 64 << 20  # v7x per-TensorCore VMEM: the safe lower bound

    resident = 2 * hw * k_pad * elem_bytes                      # pooling matrix
    per_row = 2 * hw * elem_bytes + 2 * k_pad * elem_bytes      # x + out tiles

    if rows < 8:
        tm = rows  # full-extent block (the only legal non-multiple-of-8 shape)
    else:
        budget = int(vmem_cap * 0.70)  # headroom for compiler scratch etc.
        tm = (budget - resident) // per_row
        # Keep >= ~8 grid steps on large inputs so v7x's two TensorCores both
        # get work on the "parallel" row axis and each still double-buffers.
        tm = min(tm, max(8, pl.cdiv(rows, 8)))
        tm = min(tm, 8192)
        tm = max(8, (tm // 8) * 8)

    usage = resident + tm * per_row
    vmem_limit = int(min(vmem_cap, usage + (16 << 20)))
    return tm, vmem_limit


def _psp_matmul(x_flat, M, tm, vmem_limit, single_buffer_m):
    rows, HW = x_flat.shape
    K_pad = M.shape[1]

    if single_buffer_m:
        # Constant index_map -> M is DMA'd once; a single buffer frees VMEM.
        m_spec = pl.BlockSpec((HW, K_pad), lambda i: (0, 0),
                              pipeline_mode=pl.Buffered(1))
    else:
        m_spec = pl.BlockSpec((HW, K_pad), lambda i: (0, 0))

    return pl.pallas_call(
        psp_kernel,
        out_shape=jax.ShapeDtypeStruct((rows, K_pad), jnp.float32),
        grid=(pl.cdiv(rows, tm),),               # ragged last block, no padding
        in_specs=[
            pl.BlockSpec((tm, HW), lambda i: (i, 0)),  # pipelined contiguous x tiles
            m_spec,                                    # resident averaging matrix
        ],
        out_specs=pl.BlockSpec((tm, K_pad), lambda i: (i, 0)),
        compiler_params=pltpu.CompilerParams(
            dimension_semantics=("parallel",),   # rows shard across TCs on v7x
            vmem_limit_bytes=vmem_limit,         # sized from usage, legal on v7x
        ),
        cost_estimate=pl.CostEstimate(
            flops=2 * rows * HW * K_pad,
            transcendentals=0,
            bytes_accessed=rows * HW * 4 + HW * K_pad * 4 + rows * K_pad * 4,
        ),
    )(x_flat, M)


def psp_module(feats):
    """feats: (N, C, H, W) float32  ->  (N, C, K) with K = 1+9+36+64 = 110."""
    n, c, H, W = feats.shape
    HW = H * W
    rows = n * c

    M_np, K = build_pool_matrix(H, W)            # (HW, K_pad=128), true K=110
    K_pad = M_np.shape[1]
    M = jnp.asarray(M_np)                        # f32 averaging weights

    # No wrapper-side dtype cast and no padding: x is streamed as-is (reshape
    # of a contiguous array is layout-only, not an HBM pass).
    x_flat = feats.reshape(rows, HW)
    if x_flat.dtype != jnp.float32:
        x_flat = x_flat.astype(jnp.float32)

    tm, vmem_limit = _choose_tm(rows, HW, K_pad)

    try:
        out = _psp_matmul(x_flat, M, tm, vmem_limit, single_buffer_m=True)
    except Exception:
        # Fallback for jax versions where pipeline_mode / Buffered(1) is not
        # supported: default double-buffered spec for the resident M.
        out = _psp_matmul(x_flat, M, tm, vmem_limit, single_buffer_m=False)

    # Only the :K column slice remains (required by the module's output shape);
    # a fused downstream consumer could read the padded (rows, 128) slab directly.
    return out[:, :K].reshape(n, c, K)


def psp_reference_numpy(feats):
    """Pure numpy reference of PSPModule.forward (adaptive pools + flatten + cat)."""
    feats = np.asarray(feats)
    n, c, H, W = feats.shape
    priors = []
    for s in SIZES:
        pooled = np.zeros((n, c, s, s), dtype=np.float32)
        for i in range(s):
            h0 = (i * H) // s
            h1 = -((-(i + 1) * H) // s)
            for j in range(s):
                w0 = (j * W) // s
                w1 = -((-(j + 1) * W) // s)
                pooled[:, :, i, j] = feats[:, :, h0:h1, w0:w1].mean(axis=(2, 3))
        priors.append(pooled.reshape(n, c, -1))
    return np.concatenate(priors, axis=-1)


if __name__ == "__main__":
    key = jax.random.PRNGKey(0)
    N, C, H, W = 2, 4, 16, 16
    x = jax.random.normal(key, (N, C, H, W), dtype=jnp.float32)

    out = psp_module(x)
    out = jax.block_until_ready(out)

    ref = psp_reference_numpy(np.asarray(x))
    assert out.shape == (N, C, sum(s * s for s in SIZES)), out.shape
    # f32 operands + f32 accumulation -> much tighter agreement than the old
    # bf16 path (tolerance also covers a possible bf16x-pass MXU decomposition).
    np.testing.assert_allclose(np.asarray(out), ref, rtol=5e-3, atol=1e-3)

    print("KERNEL_OK")
</pallas_src>

<mosaic_0001>
module attributes {stable_mosaic.version = 11 : i64} {
  func.func @psp_kernel(%arg0: i32, %arg1: memref<8x256xf32, #tpu.memory_space<vmem>>, %arg2: memref<256x128xf32, #tpu.memory_space<vmem>>, %arg3: memref<8x128xf32, #tpu.memory_space<vmem>>) attributes {dimension_semantics = [#tpu.dimension_semantics<parallel>], iteration_bounds = array<i64: 1>, scalar_prefetch = 0 : i64, scratch_operands = 0 : i64, tpu.core_type = #tpu.core_type<tc>, window_params = [{transform_indices = @transform_0, window_bounds = array<i64: 8, 256>}, {pipeline_mode = #tpu.pipeline_mode<synchronous>, transform_indices = @transform_1, window_bounds = array<i64: 256, 128>}, {transform_indices = @transform_2, window_bounds = array<i64: 8, 128>}]} {
    %c0 = arith.constant 0 : index
    %c0_0 = arith.constant 0 : index
    %0 = vector.load %arg1[%c0, %c0_0] : memref<8x256xf32, #tpu.memory_space<vmem>>, vector<8x256xf32>
    %c0_1 = arith.constant 0 : index
    %c0_2 = arith.constant 0 : index
    %1 = vector.load %arg2[%c0_1, %c0_2] : memref<256x128xf32, #tpu.memory_space<vmem>>, vector<256x128xf32>
    %cst = arith.constant dense<0.000000e+00> : vector<8x128xf32>
    %2 = tpu.matmul %0, %1, %cst {dimension_numbers = #tpu.dot_dimension_numbers<[1], [0], [0], [1], [0, 0, 1, 1], [], []>} : vector<8x256xf32>, vector<256x128xf32>, vector<8x128xf32> -> vector<8x128xf32>
    %c0_3 = arith.constant 0 : index
    %c0_4 = arith.constant 0 : index
    %3 = vector.load %arg3[%c0_3, %c0_4] : memref<8x128xf32, #tpu.memory_space<vmem>>, vector<8x128xf32>
    tpu.vector_store %arg3[%c0_3, %c0_4], %2 {strides = array<i32>} : memref<8x128xf32, #tpu.memory_space<vmem>>, vector<8x128xf32>,
    return
  }
  func.func @transform_0(%arg0: i32) -> (i32, i32) {
    %c0_i32 = arith.constant 0 : i32
    %c0_i32_0 = arith.constant 0 : i32
    return %arg0, %c0_i32 : i32, i32
  }
  func.func @transform_1(%arg0: i32) -> (i32, i32) {
    %c0_i32 = arith.constant 0 : i32
    %c0_i32_0 = arith.constant 0 : i32
    %c0_i32_1 = arith.constant 0 : i32
    return %c0_i32, %c0_i32_0 : i32, i32
  }
  func.func @transform_2(%arg0: i32) -> (i32, i32) {
    %c0_i32 = arith.constant 0 : i32
    %c0_i32_0 = arith.constant 0 : i32
    return %arg0, %c0_i32 : i32, i32
  }
}

module attributes {stable_mosaic.version = 11 : i64} {
  func.func @psp_kernel(%arg0: i32, %arg1: memref<8x256xf32, #tpu.memory_space<vmem>>, %arg2: memref<256x128xf32, #tpu.memory_space<vmem>>, %arg3: memref<8x128xf32, #tpu.memory_space<vmem>>) attributes {dimension_semantics = [#tpu.dimension_semantics<parallel>], iteration_bounds = array<i64: 1>, scalar_prefetch = 0 : i64, scratch_operands = 0 : i64, tpu.core_type = #tpu.core_type<tc>, window_params = [{transform_indices = @transform_0, window_bounds = array<i64: 8, 256>}, {pipeline_mode = #tpu.pipeline_mode<synchronous>, transform_indices = @transform_1, window_bounds = array<i64: 256, 128>}, {transform_indices = @transform_2, window_bounds = array<i64: 8, 128>}]} {
    %c0 = arith.constant 0 : index
    %c0_0 = arith.constant 0 : index
    %0 = vector.load %arg1[%c0, %c0_0] : memref<8x256xf32, #tpu.memory_space<vmem>>, vector<8x256xf32>
    %c0_1 = arith.constant 0 : index
    %c0_2 = arith.constant 0 : index
    %1 = vector.load %arg2[%c0_1, %c0_2] : memref<256x128xf32, #tpu.memory_space<vmem>>, vector<256x128xf32>
    %cst = arith.constant dense<0.000000e+00> : vector<8x128xf32>
    %2 = tpu.matmul %0, %1, %cst {dimension_numbers = #tpu.dot_dimension_numbers<[1], [0], [0], [1], [0, 0, 1, 1], [], []>} : vector<8x256xf32>, vector<256x128xf32>, vector<8x128xf32> -> vector<8x128xf32>
    %c0_3 = arith.constant 0 : index
    %c0_4 = arith.constant 0 : index
    %3 = vector.load %arg3[%c0_3, %c0_4] : memref<8x128xf32, #tpu.memory_space<vmem>>, vector<8x128xf32>
    tpu.vector_store %arg3[%c0_3, %c0_4], %2 {strides = array<i32>} : memref<8x128xf32, #tpu.memory_space<vmem>>, vector<8x128xf32>,
    return
  }
  func.func @transform_0(%arg0: i32) -> (i32, i32) {
    %c0_i32 = arith.constant 0 : i32
    %c0_i32_0 = arith.constant 0 : i32
    return %arg0, %c0_i32 : i32, i32
  }
  func.func @transform_1(%arg0: i32) -> (i32, i32) {
    %c0_i32 = arith.constant 0 : i32
    %c0_i32_0 = arith.constant 0 : i32
    %c0_i32_1 = arith.constant 0 : i32
    return %c0_i32, %c0_i32_0 : i32, i32
  }
  func.func @transform_2(%arg0: i32) -> (i32, i32) {
    %c0_i32 = arith.constant 0 : i32
    %c0_i32_0 = arith.constant 0 : i32
    return %arg0, %c0_i32 : i32, i32
  }
}

</mosaic_0001>

<llo_original>
// kernel: tpu_custom_call.1
$region0: #{tpu_custom_call.1}
  #allocation0 [shape = 'u32[]', space=smem, size = 0x4, offset = 0x4, fixed_abs, tag = 'smem constant byte address 0x4 - core index']
  #allocation1 [shape = 'u32[144,128]{1,0:T(1,128)}', space=vmem, size = 0x12000, scoped, tag = 'internal scratch']
  %s0 = inlined_call_operand.hbm [shape: f32[8,256], index: 0, kind: input, shape index: {}]
  %s1 = inlined_call_operand.hbm [shape: f32[256,128], index: 1, kind: input, shape index: {}]
  %s2 = inlined_call_operand.hbm [shape: f32[8,128], index: 2, kind: output, shape index: {}]
  %s3 = sld [smem:[#allocation0]]
  $region26: #{tpu_custom_call.1} parent=0
    _
  %s5 = ssub.s32 1, %s3
  %s6 = scalar_select 0, %s5, %s3
  $region1: #{tpu_custom_call.1} parent=0
    #allocation2 [shape = 'u8[8192]{0}', space=vmem, size = 0x2000, scoped, tag = 'input window, operand 0, single buffered']
    #allocation3 [shape = 's32[1]{0}', space=sflag, size = 0x4, scoped, tag = 'scoped memory for tpu_custom_call.1']
    #allocation4 [shape = 's32[1]{0}', space=sflag, size = 0x4, scoped, tag = 'scoped memory for tpu_custom_call.1']
    #allocation5 [shape = 'u8[131072]{0}', space=vmem, size = 0x20000, scoped, tag = 'input window, operand 1, single buffered']
    #allocation6 [shape = 's32[1]{0}', space=sflag, size = 0x4, scoped, tag = 'scoped memory for tpu_custom_call.1']
    #allocation7 [shape = 'u8[4096]{0}', space=vmem, size = 0x1000, scoped, tag = 'output window, operand 0, single buffered']
    %7 = vsyncpa [#allocation3], 0
    %8 = vsyncpa [#allocation6], 0
    %9 = vsyncpa [#allocation4], 0
    // Predicated region
    $region2: #{tpu_custom_call.1} parent=1 // pred_check
      _
    $region3: #{tpu_custom_call.1} parent=1 // pred_check_branch
      %11 = sbr.rel (0) target = $region5
    $region4: #{tpu_custom_call.1} parent=1 // pred_region
      %s13 = ssub.s32 256, 256
      %14 = vsyncadd [#allocation3], %s13
      %s16 = sshll.u32 [#allocation2], 4
      %s17 = int_to_ptr.vmem [resolvable:$true] %s16
      %19 = dma.hbm_to_vmem [thread:$0]  %s0, 256, %s17, [#allocation3]
    $region5: #{tpu_custom_call.1} parent=1 // pred_fallthru
      _
    // Predicated region
    $region6: #{tpu_custom_call.1} parent=1 // pred_check
      _
    $region7: #{tpu_custom_call.1} parent=1 // pred_check_branch
      %21 = sbr.rel (0) target = $region9
    $region8: #{tpu_custom_call.1} parent=1 // pred_region
      %s23 = ssub.s32 4096, 4096
      %24 = vsyncadd [#allocation6], %s23
      %s25 = sshll.u32 [#allocation5], 4
      %s26 = int_to_ptr.vmem [resolvable:$true] %s25
      %31 = dma.hbm_to_vmem [thread:$0]  %s1, 4096, %s26, [#allocation6], 128, 128, 8
    $region9: #{tpu_custom_call.1} parent=1 // pred_fallthru
      _
    // Predicated region
    $region10: #{tpu_custom_call.1} parent=1 // pred_check
      _
    $region11: #{tpu_custom_call.1} parent=1 // pred_check_branch
      %33 = sbr.rel (0) target = $region13
    $region12: #{tpu_custom_call.1} parent=1 // pred_region
      %34 = dma.done [#allocation3], 256
    $region13: #{tpu_custom_call.1} parent=1 // pred_fallthru
      _
    // Predicated region
    $region14: #{tpu_custom_call.1} parent=1 // pred_check
      _
    $region15: #{tpu_custom_call.1} parent=1 // pred_check_branch
      %36 = sbr.rel (0) target = $region17
    $region16: #{tpu_custom_call.1} parent=1 // pred_region
      %37 = dma.done [#allocation6], 4096
    $region17: #{tpu_custom_call.1} parent=1 // pred_fallthru
      _
    %v38 = vld [vmem:[#allocation2] sm:$0xff]
    %v39 = vld [vmem:[#allocation2 + $0x8] sm:$0xff]
    %v40 = vld [vmem:[#allocation5] sm:$0xff]
    %v41 = vld [vmem:[#allocation5 + $0x8] sm:$0xff]
    %v42 = vld [vmem:[#allocation5 + $0x10] sm:$0xff]
    %v43 = vld [vmem:[#allocation5 + $0x18] sm:$0xff]
    %v44 = vld [vmem:[#allocation5 + $0x20] sm:$0xff]
    %v45 = vld [vmem:[#allocation5 + $0x28] sm:$0xff]
    %v46 = vld [vmem:[#allocation5 + $0x30] sm:$0xff]
    %v47 = vld [vmem:[#allocation5 + $0x38] sm:$0xff]
    %v48 = vld [vmem:[#allocation5 + $0x40] sm:$0xff]
    %v49 = vld [vmem:[#allocation5 + $0x48] sm:$0xff]
    %v50 = vld [vmem:[#allocation5 + $0x50] sm:$0xff]
    %v51 = vld [vmem:[#allocation5 + $0x58] sm:$0xff]
    %v52 = vld [vmem:[#allocation5 + $0x60] sm:$0xff]
    %v53 = vld [vmem:[#allocation5 + $0x68] sm:$0xff]
    %v54 = vld [vmem:[#allocation5 + $0x70] sm:$0xff]
    %v55 = vld [vmem:[#allocation5 + $0x78] sm:$0xff]
    %v56 = vld [vmem:[#allocation5 + $0x80] sm:$0xff]
    %v57 = vld [vmem:[#allocation5 + $0x88] sm:$0xff]
    %v58 = vld [vmem:[#allocation5 + $0x90] sm:$0xff]
    %v59 = vld [vmem:[#allocation5 + $0x98] sm:$0xff]
    %v60 = vld [vmem:[#allocation5 + $0xa0] sm:$0xff]
    %v61 = vld [vmem:[#allocation5 + $0xa8] sm:$0xff]
    %v62 = vld [vmem:[#allocation5 + $0xb0] sm:$0xff]
    %v63 = vld [vmem:[#allocation5 + $0xb8] sm:$0xff]
    %v64 = vld [vmem:[#allocation5 + $0xc0] sm:$0xff]
    %v65 = vld [vmem:[#allocation5 + $0xc8] sm:$0xff]
    %v66 = vld [vmem:[#allocation5 + $0xd0] sm:$0xff]
    %v67 = vld [vmem:[#allocation5 + $0xd8] sm:$0xff]
    %v68 = vld [vmem:[#allocation5 + $0xe0] sm:$0xff]
    %v69 = vld [vmem:[#allocation5 + $0xe8] sm:$0xff]
    %v70 = vld [vmem:[#allocation5 + $0xf0] sm:$0xff]
    %v71 = vld [vmem:[#allocation5 + $0xf8] sm:$0xff]
    %72 = vmatprep.subr.mxu0 0.0
    %73 = vmatpush1.msra.mxu0 %v55
    %74 = vmatprep.subr.mxu0 0.0
    %75 = vmatpush1.msra.mxu0 %v54
    %76 = vmatprep.subr.mxu0 0.0
    %77 = vmatpush1.msra.mxu0 %v53
    %78 = vmatprep.subr.mxu0 0.0
    %79 = vmatpush1.msra.mxu0 %v52
    %80 = vmatprep.subr.mxu0 0.0
    %81 = vmatpush1.msra.mxu0 %v51
    %82 = vmatprep.subr.mxu0 0.0
    %83 = vmatpush1.msra.mxu0 %v50
    %84 = vmatprep.subr.mxu0 0.0
    %85 = vmatpush1.msra.mxu0 %v49
    %86 = vmatprep.subr.mxu0 0.0
    %87 = vmatpush1.msra.mxu0 %v48
    %88 = vmatprep.subr.mxu0 0.0
    %89 = vmatpush1.msra.mxu0 %v47
    %90 = vmatprep.subr.mxu0 0.0
    %91 = vmatpush1.msra.mxu0 %v46
    %92 = vmatprep.subr.mxu0 0.0
    %93 = vmatpush1.msra.mxu0 %v45
    %94 = vmatprep.subr.mxu0 0.0
    %95 = vmatpush1.msra.mxu0 %v44
    %96 = vmatprep.subr.mxu0 0.0
    %97 = vmatpush1.msra.mxu0 %v43
    %98 = vmatprep.subr.mxu0 0.0
    %99 = vmatpush1.msra.mxu0 %v42
    %100 = vmatprep.subr.mxu0 0.0
    %101 = vmatpush1.msra.mxu0 %v41
    %102 = vmatprep.subr.mxu0 0.0
    %103 = vmatpush1.msra.mxu0 %v40
    %104 = vmatprep.subr.mxu0 0.0
    %105 = vmatpush2.msra.mxu0 %v71
    %106 = vmatprep.subr.mxu0 0.0
    %107 = vmatpush2.msra.mxu0 %v70
    %108 = vmatprep.subr.mxu0 0.0
    %109 = vmatpush2.msra.mxu0 %v69
    %110 = vmatprep.subr.mxu0 0.0
    %111 = vmatpush2.msra.mxu0 %v68
    %112 = vmatprep.subr.mxu0 0.0
    %113 = vmatpush2.msra.mxu0 %v67
    %114 = vmatprep.subr.mxu0 0.0
    %115 = vmatpush2.msra.mxu0 %v66
    %116 = vmatprep.subr.mxu0 0.0
    %117 = vmatpush2.msra.mxu0 %v65
    %118 = vmatprep.subr.mxu0 0.0
    %119 = vmatpush2.msra.mxu0 %v64
    %120 = vmatprep.subr.mxu0 0.0
    %121 = vmatpush2.msra.mxu0 %v63
    %122 = vmatprep.subr.mxu0 0.0
    %123 = vmatpush2.msra.mxu0 %v62
    %124 = vmatprep.subr.mxu0 0.0
    %125 = vmatpush2.msra.mxu0 %v61
    %126 = vmatprep.subr.mxu0 0.0
    %127 = vmatpush2.msra.mxu0 %v60
    %128 = vmatprep.subr.mxu0 0.0
    %129 = vmatpush2.msra.mxu0 %v59
    %130 = vmatprep.subr.mxu0 0.0
    %131 = vmatpush2.msra.mxu0 %v58
    %132 = vmatprep.subr.mxu0 0.0
    %133 = vmatpush2.msra.mxu0 %v57
    %134 = vmatprep.subr.mxu0 0.0
    %135 = vmatpush2.msra.mxu0 %v56
    %136 = vmatprep.mubr.f32.mxu0 %v39
    %137 = vmatmul.mubr.f32.gmra.mxu0 %v38
    %v138 = vpop.f32.mrf.mxu0
    %v139 = vadd.f32 0.0, %v138
    %v140 = vpop.f32.mrf.mxu0
    %141 = vdwg.mxu0
    %142 = vst [vmem:[#allocation7] sm:$0xff] %v139
    // Predicated region
    $region18: #{tpu_custom_call.1} parent=1 // pred_check
      _
    $region19: #{tpu_custom_call.1} parent=1 // pred_check_branch
      %144 = sbr.rel (0) target = $region21
    $region20: #{tpu_custom_call.1} parent=1 // pred_region
      %s146 = ssub.s32 128, 128
      %147 = vsyncadd [#allocation4], %s146
      %s149 = sshll.u32 [#allocation7], 4
      %s150 = int_to_ptr.vmem [resolvable:$true] %s149
      %152 = dma.vmem_to_hbm [thread:$0]  %s150, 128, %s2, [#allocation4]
    $region21: #{tpu_custom_call.1} parent=1 // pred_fallthru
      _
    // Predicated region
    $region22: #{tpu_custom_call.1} parent=1 // pred_check
      _
    $region23: #{tpu_custom_call.1} parent=1 // pred_check_branch
      %154 = sbr.rel (0) target = $region25
    $region24: #{tpu_custom_call.1} parent=1 // pred_region
      %155 = dma.done [#allocation4], 128
    $region25: #{tpu_custom_call.1} parent=1 // pred_fallthru
      _
    %156 = vsyncpa [#allocation3], 1
    %157 = vsyncpa [#allocation6], 1
    %158 = vsyncpa [#allocation4], 1

// kernel: tpu_custom_call.1
$region0: #{tpu_custom_call.1}
  #allocation0 [shape = 'u32[]', space=smem, size = 0x4, offset = 0x4, fixed_abs, tag = 'smem constant byte address 0x4 - core index']
  #allocation1 [shape = 'u32[144,128]{1,0:T(1,128)}', space=vmem, size = 0x12000, scoped, tag = 'internal scratch']
  %s0 = inlined_call_operand.hbm [shape: f32[8,256], index: 0, kind: input, shape index: {}]
  %s1 = inlined_call_operand.hbm [shape: f32[256,128], index: 1, kind: input, shape index: {}]
  %s2 = inlined_call_operand.hbm [shape: f32[8,128], index: 2, kind: output, shape index: {}]
  %s3 = sld [smem:[#allocation0]]
  $region26: #{tpu_custom_call.1} parent=0
    _
  %s5 = ssub.s32 1, %s3
  %s6 = scalar_select 0, %s5, %s3
  $region1: #{tpu_custom_call.1} parent=0
    #allocation2 [shape = 'u8[8192]{0}', space=vmem, size = 0x2000, scoped, tag = 'input window, operand 0, single buffered']
    #allocation3 [shape = 's32[1]{0}', space=sflag, size = 0x4, scoped, tag = 'scoped memory for tpu_custom_call.1']
    #allocation4 [shape = 's32[1]{0}', space=sflag, size = 0x4, scoped, tag = 'scoped memory for tpu_custom_call.1']
    #allocation5 [shape = 'u8[131072]{0}', space=vmem, size = 0x20000, scoped, tag = 'input window, operand 1, single buffered']
    #allocation6 [shape = 's32[1]{0}', space=sflag, size = 0x4, scoped, tag = 'scoped memory for tpu_custom_call.1']
    #allocation7 [shape = 'u8[4096]{0}', space=vmem, size = 0x1000, scoped, tag = 'output window, operand 0, single buffered']
    %7 = vsyncpa [#allocation3], 0
    %8 = vsyncpa [#allocation6], 0
    %9 = vsyncpa [#allocation4], 0
    // Predicated region
    $region2: #{tpu_custom_call.1} parent=1 // pred_check
      _
    $region3: #{tpu_custom_call.1} parent=1 // pred_check_branch
      %11 = sbr.rel (0) target = $region5
    $region4: #{tpu_custom_call.1} parent=1 // pred_region
      %s13 = ssub.s32 256, 256
      %14 = vsyncadd [#allocation3], %s13
      %s16 = sshll.u32 [#allocation2], 4
      %s17 = int_to_ptr.vmem [resolvable:$true] %s16
      %19 = dma.hbm_to_vmem [thread:$0]  %s0, 256, %s17, [#allocation3]
    $region5: #{tpu_custom_call.1} parent=1 // pred_fallthru
      _
    // Predicated region
    $region6: #{tpu_custom_call.1} parent=1 // pred_check
      _
    $region7: #{tpu_custom_call.1} parent=1 // pred_check_branch
      %21 = sbr.rel (0) target = $region9
    $region8: #{tpu_custom_call.1} parent=1 // pred_region
      %s23 = ssub.s32 4096, 4096
      %24 = vsyncadd [#allocation6], %s23
      %s25 = sshll.u32 [#allocation5], 4
      %s26 = int_to_ptr.vmem [resolvable:$true] %s25
      %31 = dma.hbm_to_vmem [thread:$0]  %s1, 4096, %s26, [#allocation6], 128, 128, 8
    $region9: #{tpu_custom_call.1} parent=1 // pred_fallthru
      _
    // Predicated region
    $region10: #{tpu_custom_call.1} parent=1 // pred_check
      _
    $region11: #{tpu_custom_call.1} parent=1 // pred_check_branch
      %33 = sbr.rel (0) target = $region13
    $region12: #{tpu_custom_call.1} parent=1 // pred_region
      %34 = dma.done [#allocation3], 256
    $region13: #{tpu_custom_call.1} parent=1 // pred_fallthru
      _
    // Predicated region
    $region14: #{tpu_custom_call.1} parent=1 // pred_check
      _
    $region15: #{tpu_custom_call.1} parent=1 // pred_check_branch
      %36 = sbr.rel (0) target = $region17
    $region16: #{tpu_custom_call.1} parent=1 // pred_region
      %37 = dma.done [#allocation6], 4096
    $region17: #{tpu_custom_call.1} parent=1 // pred_fallthru
      _
    %v38 = vld [vmem:[#allocation2] sm:$0xff]
    %v39 = vld [vmem:[#allocation2 + $0x8] sm:$0xff]
    %v40 = vld [vmem:[#allocation5] sm:$0xff]
    %v41 = vld [vmem:[#allocation5 + $0x8] sm:$0xff]
    %v42 = vld [vmem:[#allocation5 + $0x10] sm:$0xff]
    %v43 = vld [vmem:[#allocation5 + $0x18] sm:$0xff]
    %v44 = vld [vmem:[#allocation5 + $0x20] sm:$0xff]
    %v45 = vld [vmem:[#allocation5 + $0x28] sm:$0xff]
    %v46 = vld [vmem:[#allocation5 + $0x30] sm:$0xff]
    %v47 = vld [vmem:[#allocation5 + $0x38] sm:$0xff]
    %v48 = vld [vmem:[#allocation5 + $0x40] sm:$0xff]
    %v49 = vld [vmem:[#allocation5 + $0x48] sm:$0xff]
    %v50 = vld [vmem:[#allocation5 + $0x50] sm:$0xff]
    %v51 = vld [vmem:[#allocation5 + $0x58] sm:$0xff]
    %v52 = vld [vmem:[#allocation5 + $0x60] sm:$0xff]
    %v53 = vld [vmem:[#allocation5 + $0x68] sm:$0xff]
    %v54 = vld [vmem:[#allocation5 + $0x70] sm:$0xff]
    %v55 = vld [vmem:[#allocation5 + $0x78] sm:$0xff]
    %v56 = vld [vmem:[#allocation5 + $0x80] sm:$0xff]
    %v57 = vld [vmem:[#allocation5 + $0x88] sm:$0xff]
    %v58 = vld [vmem:[#allocation5 + $0x90] sm:$0xff]
    %v59 = vld [vmem:[#allocation5 + $0x98] sm:$0xff]
    %v60 = vld [vmem:[#allocation5 + $0xa0] sm:$0xff]
    %v61 = vld [vmem:[#allocation5 + $0xa8] sm:$0xff]
    %v62 = vld [vmem:[#allocation5 + $0xb0] sm:$0xff]
    %v63 = vld [vmem:[#allocation5 + $0xb8] sm:$0xff]
    %v64 = vld [vmem:[#allocation5 + $0xc0] sm:$0xff]
    %v65 = vld [vmem:[#allocation5 + $0xc8] sm:$0xff]
    %v66 = vld [vmem:[#allocation5 + $0xd0] sm:$0xff]
    %v67 = vld [vmem:[#allocation5 + $0xd8] sm:$0xff]
    %v68 = vld [vmem:[#allocation5 + $0xe0] sm:$0xff]
    %v69 = vld [vmem:[#allocation5 + $0xe8] sm:$0xff]
    %v70 = vld [vmem:[#allocation5 + $0xf0] sm:$0xff]
    %v71 = vld [vmem:[#allocation5 + $0xf8] sm:$0xff]
    %72 = vmatprep.subr.mxu0 0.0
    %73 = vmatpush1.msra.mxu0 %v55
    %74 = vmatprep.subr.mxu0 0.0
    %75 = vmatpush1.msra.mxu0 %v54
    %76 = vmatprep.subr.mxu0 0.0
    %77 = vmatpush1.msra.mxu0 %v53
    %78 = vmatprep.subr.mxu0 0.0
    %79 = vmatpush1.msra.mxu0 %v52
    %80 = vmatprep.subr.mxu0 0.0
    %81 = vmatpush1.msra.mxu0 %v51
    %82 = vmatprep.subr.mxu0 0.0
    %83 = vmatpush1.msra.mxu0 %v50
    %84 = vmatprep.subr.mxu0 0.0
    %85 = vmatpush1.msra.mxu0 %v49
    %86 = vmatprep.subr.mxu0 0.0
    %87 = vmatpush1.msra.mxu0 %v48
    %88 = vmatprep.subr.mxu0 0.0
    %89 = vmatpush1.msra.mxu0 %v47
    %90 = vmatprep.subr.mxu0 0.0
    %91 = vmatpush1.msra.mxu0 %v46
    %92 = vmatprep.subr.mxu0 0.0
    %93 = vmatpush1.msra.mxu0 %v45
    %94 = vmatprep.subr.mxu0 0.0
    %95 = vmatpush1.msra.mxu0 %v44
    %96 = vmatprep.subr.mxu0 0.0
    %97 = vmatpush1.msra.mxu0 %v43
    %98 = vmatprep.subr.mxu0 0.0
    %99 = vmatpush1.msra.mxu0 %v42
    %100 = vmatprep.subr.mxu0 0.0
    %101 = vmatpush1.msra.mxu0 %v41
    %102 = vmatprep.subr.mxu0 0.0
    %103 = vmatpush1.msra.mxu0 %v40
    %104 = vmatprep.subr.mxu0 0.0
    %105 = vmatpush2.msra.mxu0 %v71
    %106 = vmatprep.subr.mxu0 0.0
    %107 = vmatpush2.msra.mxu0 %v70
    %108 = vmatprep.subr.mxu0 0.0
    %109 = vmatpush2.msra.mxu0 %v69
    %110 = vmatprep.subr.mxu0 0.0
    %111 = vmatpush2.msra.mxu0 %v68
    %112 = vmatprep.subr.mxu0 0.0
    %113 = vmatpush2.msra.mxu0 %v67
    %114 = vmatprep.subr.mxu0 0.0
    %115 = vmatpush2.msra.mxu0 %v66
    %116 = vmatprep.subr.mxu0 0.0
    %117 = vmatpush2.msra.mxu0 %v65
    %118 = vmatprep.subr.mxu0 0.0
    %119 = vmatpush2.msra.mxu0 %v64
    %120 = vmatprep.subr.mxu0 0.0
    %121 = vmatpush2.msra.mxu0 %v63
    %122 = vmatprep.subr.mxu0 0.0
    %123 = vmatpush2.msra.mxu0 %v62
    %124 = vmatprep.subr.mxu0 0.0
    %125 = vmatpush2.msra.mxu0 %v61
    %126 = vmatprep.subr.mxu0 0.0
    %127 = vmatpush2.msra.mxu0 %v60
    %128 = vmatprep.subr.mxu0 0.0
    %129 = vmatpush2.msra.mxu0 %v59
    %130 = vmatprep.subr.mxu0 0.0
    %131 = vmatpush2.msra.mxu0 %v58
    %132 = vmatprep.subr.mxu0 0.0
    %133 = vmatpush2.msra.mxu0 %v57
    %134 = vmatprep.subr.mxu0 0.0
    %135 = vmatpush2.msra.mxu0 %v56
    %136 = vmatprep.mubr.f32.mxu0 %v39
    %137 = vmatmul.mubr.f32.gmra.mxu0 %v38
    %v138 = vpop.f32.mrf.mxu0
    %v139 = vadd.f32 0.0, %v138
    %v140 = vpop.f32.mrf.mxu0
    %141 = vdwg.mxu0
    %142 = vst [vmem:[#allocation7] sm:$0xff] %v139
    // Predicated region
    $region18: #{tpu_custom_call.1} parent=1 // pred_check
      _
    $region19: #{tpu_custom_call.1} parent=1 // pred_check_branch
      %144 = sbr.rel (0) target = $region21
    $region20: #{tpu_custom_call.1} parent=1 // pred_region
      %s146 = ssub.s32 128, 128
      %147 = vsyncadd [#allocation4], %s146
      %s149 = sshll.u32 [#allocation7], 4
      %s150 = int_to_ptr.vmem [resolvable:$true] %s149
      %152 = dma.vmem_to_hbm [thread:$0]  %s150, 128, %s2, [#allocation4]
    $region21: #{tpu_custom_call.1} parent=1 // pred_fallthru
      _
    // Predicated region
    $region22: #{tpu_custom_call.1} parent=1 // pred_check
      _
    $region23: #{tpu_custom_call.1} parent=1 // pred_check_branch
      %154 = sbr.rel (0) target = $region25
    $region24: #{tpu_custom_call.1} parent=1 // pred_region
      %155 = dma.done [#allocation4], 128
    $region25: #{tpu_custom_call.1} parent=1 // pred_fallthru
      _
    %156 = vsyncpa [#allocation3], 1
    %157 = vsyncpa [#allocation6], 1
    %158 = vsyncpa [#allocation4], 1

</llo_original>
